<compile_context>
chip_gen: v7x
topology: tpu7x:2x2x1
jax: 0.10.0
libtpu: 0.0.40
codegen_flags: <defaults>
</compile_context>

<pallas_src>
import jax
import jax.numpy as jnp
from jax import lax
from jax.experimental import pallas as pl
from jax.experimental.pallas import tpu as pltpu


# Per-input-block VMEM budget. Inputs are double-buffered by the pipeline, so
# the live input footprint is ~2x this (~16 MiB); together with the small f32
# accumulator and output tile this stays well under the 48 MiB scoped limit we
# request below (v7x physical VMEM is 64 MiB; v5e/v6e have 128 MiB).
_VMEM_BLOCK_BUDGET_BYTES = 8 * 1024 * 1024
_VMEM_LIMIT_BYTES = 48 * 1024 * 1024


def _round_up(x: int, m: int) -> int:
    return ((x + m - 1) // m) * m


def _pick_batch_tile(B: int) -> int:
    # Output block is (TB, TD): TB must be a multiple of 8 (sublane) or == B.
    return 8 if B % 8 == 0 else B


def _pick_feature_tile(B: int, TB: int, D: int) -> int:
    """Split D into >=2 parallel blocks only when the batch axis cannot provide
    two parallel grid blocks (keeps both v7x TensorCores busy for small B)."""
    if (B // TB) >= 2 or D % 128 != 0 or D < 256:
        return D
    td = (D // 2) // 128 * 128
    while td >= 128:
        if D % td == 0:
            return td
        td -= 128
    return D


def _seq_granule(itemsize: int) -> int:
    # Sublane packing: 8 rows/vreg at 4B, 16 at 2B, 32 at 1B dtypes.
    return 8 * max(1, 4 // itemsize)


def _pick_seq_tile(S: int, TB: int, TD: int, itemsize: int, granule: int,
                   seq_block=None) -> int:
    if seq_block is not None:
        return max(granule, (int(seq_block) // granule) * granule)
    max_ts = (_VMEM_BLOCK_BUDGET_BYTES // (TB * TD * itemsize)) // granule * granule
    ts = min(max(max_ts, granule), _round_up(S, granule))
    return ts


def _make_pool_kernel(pool_type: str, S: int, TB: int, TS: int, TD: int,
                      acc_dtype, x_dtype, ragged: bool):
    if pool_type not in ("max", "mean", "sum"):
        raise NotImplementedError(f"pool type: {pool_type} is not supported")

    floating = jnp.issubdtype(x_dtype, jnp.floating)
    if pool_type == "max":
        pad_scalar = float("-inf") if floating else int(jnp.iinfo(x_dtype).min)
    else:
        pad_scalar = 0

    def kernel(x_ref, o_ref, acc_ref):
        k = pl.program_id(2)
        nk = pl.num_programs(2)

        @pl.when(k == 0)
        def _init():
            if pool_type == "max":
                if jnp.issubdtype(acc_dtype, jnp.floating):
                    acc_ref[...] = jnp.full_like(acc_ref, -jnp.inf)
                else:
                    acc_ref[...] = jnp.full_like(acc_ref,
                                                 jnp.iinfo(acc_dtype).min)
            else:
                acc_ref[...] = jnp.zeros_like(acc_ref)

        def accum(xv):
            # (TB, TS, TD) -> (TB, TS//8, 8, TD): the group axis is an outer
            # (non-sublane) dim, so this per-step reduction is pure VPU
            # add/max on whole vregs; the 8-wide cross-sublane reduce is
            # deferred to the finalize below.
            xr = xv.reshape(TB, TS // 8, 8, TD)
            if pool_type == "max":
                acc_ref[...] = jnp.maximum(
                    acc_ref[...], jnp.max(xr, axis=1).astype(acc_dtype))
            else:
                # f32/int32 accumulation fused into the reduction.
                acc_ref[...] = acc_ref[...] + jnp.sum(xr, axis=1,
                                                      dtype=acc_dtype)

        x = x_ref[...]  # (TB, TS, TD)
        if ragged:
            # Only the last seq block can contain out-of-range rows; mask them
            # with the reduction identity using absolute sequence indices.
            @pl.when(k == nk - 1)
            def _tail():
                idx = lax.broadcasted_iota(jnp.int32, (TS, TD), 0) + k * TS
                mask = (idx < S)[None]  # (1, TS, TD) broadcast over TB
                accum(jnp.where(mask, x, jnp.array(pad_scalar, dtype=x.dtype)))

            @pl.when(k != nk - 1)
            def _full():
                accum(x)
        else:
            accum(x)

        @pl.when(k == nk - 1)
        def _finalize():
            a = acc_ref[...]  # (TB, 8, TD)
            if pool_type == "max":
                r = jnp.max(a, axis=1)
            else:
                r = jnp.sum(a, axis=1)
                if pool_type == "mean":
                    r = r / S  # true S (masked rows contributed 0)
            o_ref[...] = r.astype(o_ref.dtype)

    return kernel


def pool(x, dim: int = 1, pool_type: str = "max", keepdim: bool = True,
         seq_block=None):
    """Pallas TPU Pool.forward for 3-D (B, S, D) inputs, dim=1."""
    # TODO(synk): other dims / ranks would need a wrapper transpose; the kernel
    # covers the (B, S, D) / dim=1 layout the module is used with.
    assert x.ndim == 3 and dim == 1, "kernel is written for (B, S, D), dim=1"
    if pool_type == "mean" and not jnp.issubdtype(x.dtype, jnp.floating):
        raise NotImplementedError("mean pooling requires a floating dtype")

    B, S, D = x.shape
    itemsize = jnp.dtype(x.dtype).itemsize
    acc_dtype = (jnp.float32 if jnp.issubdtype(x.dtype, jnp.floating)
                 else jnp.int32)

    TB = _pick_batch_tile(B)
    TD = _pick_feature_tile(B, TB, D)
    granule = _seq_granule(itemsize)
    TS = _pick_seq_tile(S, TB, TD, itemsize, granule, seq_block)

    nb = B // TB
    nd = D // TD
    nk = pl.cdiv(S, TS)
    ragged = (S % TS) != 0

    kernel = _make_pool_kernel(pool_type, S, TB, TS, TD, acc_dtype, x.dtype,
                               ragged)

    cost = pl.CostEstimate(
        flops=B * S * D,
        transcendentals=0,
        bytes_accessed=B * S * D * itemsize + B * D * itemsize,
    )

    out2d = pl.pallas_call(
        kernel,
        out_shape=jax.ShapeDtypeStruct((B, D), x.dtype),
        grid_spec=pltpu.PrefetchScalarGridSpec(
            num_scalar_prefetch=0,
            grid=(nb, nd, nk),
            in_specs=[pl.BlockSpec((TB, TS, TD), lambda b, d, k: (b, k, d))],
            # Same output block across the seq axis -> resident accumulator
            # tile, written back once after the final k step.
            out_specs=pl.BlockSpec((TB, TD), lambda b, d, k: (b, d)),
            scratch_shapes=[pltpu.VMEM((TB, 8, TD), acc_dtype)],
        ),
        compiler_params=pltpu.CompilerParams(
            dimension_semantics=("parallel", "parallel", "arbitrary"),
            vmem_limit_bytes=_VMEM_LIMIT_BYTES,
        ),
        cost_estimate=cost,
    )(x)

    if keepdim:
        return jnp.expand_dims(out2d, axis=dim)
    return out2d


if __name__ == "__main__":
    key = jax.random.PRNGKey(0)
    ok = True

    # Small shapes exercising: single-block baseline, D-split (2 parallel
    # feature blocks), multi-step reduction with a ragged masked tail, and a
    # bf16 (granule-16) path.
    configs = [
        # (B,  S,   D,  dtype,        seq_block)
        (2,   8, 128, jnp.float32,  None),
        (2,  24, 256, jnp.float32,  None),
        (8,  50, 128, jnp.float32,  16),
        (8,  32, 128, jnp.bfloat16, None),
    ]

    for (B, S, D, dtype, sb) in configs:
        key, sub = jax.random.split(key)
        x = jax.random.normal(sub, (B, S, D), dtype=jnp.float32).astype(dtype)
        xf = x.astype(jnp.float32)
        rtol = 1e-5 if dtype == jnp.float32 else 1e-2
        atol = 1e-4 if dtype == jnp.float32 else 1e-2

        for pool_type in ("max", "mean", "sum"):
            y = pool(x, dim=1, pool_type=pool_type, keepdim=True, seq_block=sb)
            jax.block_until_ready(y)

            if pool_type == "max":
                ref = jnp.max(xf, axis=1, keepdims=True)
            elif pool_type == "mean":
                ref = jnp.mean(xf, axis=1, keepdims=True)
            else:
                ref = jnp.sum(xf, axis=1, keepdims=True)

            if y.shape != (B, 1, D) or not jnp.allclose(
                    y.astype(jnp.float32), ref, atol=atol, rtol=rtol):
                ok = False

    # keepdim=False path
    key, sub = jax.random.split(key)
    x = jax.random.normal(sub, (2, 8, 128), dtype=jnp.float32)
    y2 = pool(x, dim=1, pool_type="max", keepdim=False)
    jax.block_until_ready(y2)
    if y2.shape != (2, 128) or not jnp.allclose(
            y2, jnp.max(x, axis=1), atol=1e-4, rtol=1e-5):
        ok = False

    if ok:
        print("KERNEL_OK")
</pallas_src>

<mosaic_0001>
module attributes {stable_mosaic.version = 11 : i64} {
  func.func @kernel(%arg0: i32, %arg1: i32, %arg2: i32, %arg3: memref<2x8x128xf32, #tpu.memory_space<vmem>>, %arg4: memref<2x128xf32, #tpu.memory_space<vmem>>, %arg5: memref<2x8x128xf32, #tpu.memory_space<vmem>>) attributes {dimension_semantics = [#tpu.dimension_semantics<parallel>, #tpu.dimension_semantics<parallel>, #tpu.dimension_semantics<arbitrary>], iteration_bounds = array<i64: 1, 1, 1>, scalar_prefetch = 0 : i64, scratch_operands = 1 : i64, tpu.core_type = #tpu.core_type<tc>, window_params = [{transform_indices = @transform_0, window_bounds = array<i64: 2, 8, 128>}, {transform_indices = @transform_1, window_bounds = array<i64: 2, 128>}]} {
    %c0_i32 = arith.constant 0 : i32
    %0 = arith.cmpi eq, %arg2, %c0_i32 : i32
    %1 = arith.extui %0 : i1 to i32
    %c0_i32_0 = arith.constant 0 : i32
    %2 = arith.cmpi ne, %1, %c0_i32_0 : i32
    scf.if %2 {
      %cst_11 = arith.constant 0xFF800000 : f32
      %12 = vector.broadcast %cst_11 : f32 to vector<2x8x128xf32>
      %c0_12 = arith.constant 0 : index
      %c0_13 = arith.constant 0 : index
      %c0_14 = arith.constant 0 : index
      %13 = vector.load %arg5[%c0_12, %c0_13, %c0_14] : memref<2x8x128xf32, #tpu.memory_space<vmem>>, vector<2x8x128xf32>
      tpu.vector_store %arg5[%c0_12, %c0_13, %c0_14], %12 {strides = array<i32>} : memref<2x8x128xf32, #tpu.memory_space<vmem>>, vector<2x8x128xf32>,
    } else {
    }
    %c0 = arith.constant 0 : index
    %c0_1 = arith.constant 0 : index
    %c0_2 = arith.constant 0 : index
    %3 = vector.load %arg3[%c0, %c0_1, %c0_2] : memref<2x8x128xf32, #tpu.memory_space<vmem>>, vector<2x8x128xf32>
    %4 = vector.shape_cast %3 : vector<2x8x128xf32> to vector<2x1x8x128xf32>
    %c0_3 = arith.constant 0 : index
    %c0_4 = arith.constant 0 : index
    %c0_5 = arith.constant 0 : index
    %5 = vector.load %arg5[%c0_3, %c0_4, %c0_5] : memref<2x8x128xf32, #tpu.memory_space<vmem>>, vector<2x8x128xf32>
    %cst = arith.constant dense<0xFF800000> : vector<2x8x128xf32>
    %6 = vector.multi_reduction <maximumf>, %4, %cst [1] : vector<2x1x8x128xf32> to vector<2x8x128xf32>
    %7 = arith.maximumf %5, %6 : vector<2x8x128xf32>
    %c0_6 = arith.constant 0 : index
    %c0_7 = arith.constant 0 : index
    %c0_8 = arith.constant 0 : index
    %8 = vector.load %arg5[%c0_6, %c0_7, %c0_8] : memref<2x8x128xf32, #tpu.memory_space<vmem>>, vector<2x8x128xf32>
    tpu.vector_store %arg5[%c0_6, %c0_7, %c0_8], %7 {strides = array<i32>} : memref<2x8x128xf32, #tpu.memory_space<vmem>>, vector<2x8x128xf32>,
    %c0_i32_9 = arith.constant 0 : i32
    %9 = arith.cmpi eq, %arg2, %c0_i32_9 : i32
    %10 = arith.extui %9 : i1 to i32
    %c0_i32_10 = arith.constant 0 : i32
    %11 = arith.cmpi ne, %10, %c0_i32_10 : i32
    scf.if %11 {
      %c0_11 = arith.constant 0 : index
      %c0_12 = arith.constant 0 : index
      %c0_13 = arith.constant 0 : index
      %12 = vector.load %arg5[%c0_11, %c0_12, %c0_13] : memref<2x8x128xf32, #tpu.memory_space<vmem>>, vector<2x8x128xf32>
      %cst_14 = arith.constant dense<0xFF800000> : vector<2x128xf32>
      %13 = vector.multi_reduction <maximumf>, %12, %cst_14 [1] : vector<2x8x128xf32> to vector<2x128xf32>
      %c0_15 = arith.constant 0 : index
      %c0_16 = arith.constant 0 : index
      %14 = vector.load %arg4[%c0_15, %c0_16] : memref<2x128xf32, #tpu.memory_space<vmem>>, vector<2x128xf32>
      tpu.vector_store %arg4[%c0_15, %c0_16], %13 {strides = array<i32>} : memref<2x128xf32, #tpu.memory_space<vmem>>, vector<2x128xf32>,
    } else {
    }
    return
  }
  func.func @transform_0(%arg0: i32, %arg1: i32, %arg2: i32) -> (i32, i32, i32) {
    %c0_i32 = arith.constant 0 : i32
    return %arg0, %arg2, %arg1 : i32, i32, i32
  }
  func.func @transform_1(%arg0: i32, %arg1: i32, %arg2: i32) -> (i32, i32) {
    %c0_i32 = arith.constant 0 : i32
    return %arg0, %arg1 : i32, i32
  }
}

</mosaic_0001>

<llo_original>
// kernel: tpu_custom_call.1
$region0: #{tpu_custom_call.1}
  #allocation0 [shape = 'u32[]', space=smem, size = 0x4, offset = 0x4, fixed_abs, tag = 'smem constant byte address 0x4 - core index']
  #allocation1 [shape = 'u32[144,128]{1,0:T(1,128)}', space=vmem, size = 0x12000, scoped, tag = 'internal scratch']
  #allocation2 [shape = 'f32[2,8,128]{2,1,0:T(8,128)}', space=vmem, size = 0x2000, scoped, tag = 'scratch operand']
  %s0 = inlined_call_operand.hbm [shape: f32[2,8,128], index: 0, kind: input, shape index: {}]
  %s1 = inlined_call_operand.hbm [shape: f32[2,128], index: 1, kind: output, shape index: {}]
  %s2 = sld [smem:[#allocation0]]
  $region26: #{tpu_custom_call.1} parent=0
    _
  %s4 = ssub.s32 1, %s2
  %s5 = scalar_select 0, %s4, %s2
  $region1: #{tpu_custom_call.1} parent=0
    #allocation3 [shape = 'u8[8192]{0}', space=vmem, size = 0x2000, scoped, tag = 'input window, operand 0, single buffered']
    #allocation4 [shape = 's32[1]{0}', space=sflag, size = 0x4, scoped, tag = 'scoped memory for tpu_custom_call.1']
    #allocation5 [shape = 's32[1]{0}', space=sflag, size = 0x4, scoped, tag = 'scoped memory for tpu_custom_call.1']
    #allocation6 [shape = 'u8[1024]{0}', space=vmem, size = 0x400, scoped, tag = 'output window, operand 0, single buffered']
    %6 = vsyncpa [#allocation4], 0
    %7 = vsyncpa [#allocation5], 0
    // Predicated region
    $region2: #{tpu_custom_call.1} parent=1 // pred_check
      _
    $region3: #{tpu_custom_call.1} parent=1 // pred_check_branch
      %9 = sbr.rel (0) target = $region5
    $region4: #{tpu_custom_call.1} parent=1 // pred_region
      %s11 = ssub.s32 256, 256
      %12 = vsyncadd [#allocation4], %s11
      %s13 = sshll.u32 [#allocation3], 4
      %s14 = int_to_ptr.vmem [resolvable:$true] %s13
      %19 = dma.hbm_to_vmem [thread:$0]  %s0, 256, %s14, [#allocation4], 128, 128, 8
    $region5: #{tpu_custom_call.1} parent=1 // pred_fallthru
      _
    // Predicated region
    $region6: #{tpu_custom_call.1} parent=1 // pred_check
      _
    $region7: #{tpu_custom_call.1} parent=1 // pred_check_branch
      %21 = sbr.rel (0) target = $region9
    $region8: #{tpu_custom_call.1} parent=1 // pred_region
      %22 = dma.done [#allocation4], 256
    $region9: #{tpu_custom_call.1} parent=1 // pred_fallthru
      _
    %p23 = scmp.eq.s32.totalorder 0, 0
    // Predicated region
    $region10: #{tpu_custom_call.1} parent=1 // pred_check
      %p24 = pneg %p23
    $region11: #{tpu_custom_call.1} parent=1 // pred_check_branch
      %26 = sbr.rel (%p24) target = $region13
    $region12: #{tpu_custom_call.1} parent=1 // pred_region
      %27 = vst [vmem:[#allocation2] sm:$0xff] -inf
      %28 = vst [vmem:[#allocation2 + $0x8] sm:$0xff] -inf
    $region13: #{tpu_custom_call.1} parent=1 // pred_fallthru
      _
    %v29 = vld [vmem:[#allocation3] sm:$0xff]
    %v30 = vld [vmem:[#allocation3 + $0x8] sm:$0xff]
    %v31 = vld [vmem:[#allocation2] sm:$0xff]
    %v32 = vld [vmem:[#allocation2 + $0x8] sm:$0xff]
    %v33 = vmax.f32 %v31, %v29
    %v34 = vmax.f32 %v32, %v30
    %35 = vst [vmem:[#allocation2] sm:$0xff] %v33
    %36 = vst [vmem:[#allocation2 + $0x8] sm:$0xff] %v34
    // Predicated region
    $region14: #{tpu_custom_call.1} parent=1 // pred_check
      %p37 = pneg %p23
    $region15: #{tpu_custom_call.1} parent=1 // pred_check_branch
      %39 = sbr.rel (%p37) target = $region17
    $region16: #{tpu_custom_call.1} parent=1 // pred_region
      %v40 = vld [vmem:[#allocation2] sm:$0xff]
      %v41 = vld [vmem:[#allocation2 + $0x8] sm:$0xff]
      %v42 = vrot.slane %v40, 4
      %v43 = vmax.f32 %v40, %v42
      %v44 = vrot.slane %v43, 2
      %v45 = vmax.f32 %v43, %v44
      %v46 = vrot.slane %v45, 1
      %v47 = vmax.f32 %v45, %v46
      %v48 = vrot.slane %v41, 4
      %v49 = vmax.f32 %v41, %v48
      %v50 = vrot.slane %v49, 2
      %v51 = vmax.f32 %v49, %v50
      %v52 = vrot.slane %v51, 1
      %v53 = vmax.f32 %v51, %v52
      %vm56 = vcmask 1041409
      %v57 = vsel %vm56, %v53, %v47
      %59 = vst [vmem:[#allocation6] sm:$0x3] %v57
    $region17: #{tpu_custom_call.1} parent=1 // pred_fallthru
      _
    // Predicated region
    $region18: #{tpu_custom_call.1} parent=1 // pred_check
      _
    $region19: #{tpu_custom_call.1} parent=1 // pred_check_branch
      %61 = sbr.rel (0) target = $region21
    $region20: #{tpu_custom_call.1} parent=1 // pred_region
      %s63 = ssub.s32 32, 32
      %64 = vsyncadd [#allocation5], %s63
      %s66 = sshll.u32 [#allocation6], 4
      %s67 = int_to_ptr.vmem [resolvable:$true] %s66
      %69 = dma.vmem_to_hbm [thread:$0]  %s67, 32, %s1, [#allocation5]
    $region21: #{tpu_custom_call.1} parent=1 // pred_fallthru
      _
    // Predicated region
    $region22: #{tpu_custom_call.1} parent=1 // pred_check
      _
    $region23: #{tpu_custom_call.1} parent=1 // pred_check_branch
      %71 = sbr.rel (0) target = $region25
    $region24: #{tpu_custom_call.1} parent=1 // pred_region
      %72 = dma.done [#allocation5], 32
    $region25: #{tpu_custom_call.1} parent=1 // pred_fallthru
      _
    %73 = vsyncpa [#allocation4], 1
    %74 = vsyncpa [#allocation5], 1

</llo_original>
